<compile_context>
chip_gen: v7x
topology: tpu7x:2x2x1
jax: 0.10.0
libtpu: 0.0.40
codegen_flags: <defaults>
</compile_context>

<pallas_src>
import functools

import jax
import jax.numpy as jnp
from jax.experimental import pallas as pl
from jax.experimental.pallas import tpu as pltpu


def _bpr_max_kernel(logit_ref, out_ref, acc_ref, *, n_total, row_tile, inv_count):
    i = pl.program_id(0)

    @pl.when(i == 0)
    def _init():
        acc_ref[...] = jnp.zeros_like(acc_ref)

    x = logit_ref[...].astype(jnp.float32)            # [TR, N]

    # --- numerically-stable softmax numerator, reused for the sigmoid ---
    row_max = jnp.max(x, axis=1, keepdims=True)
    e = jnp.exp(x - row_max)                          # in (0, 1]; the only exp
    sum_e = jnp.sum(e, axis=1, keepdims=True)         # >= 1 for real rows

    # --- diagonal of e: iota mask + row-reduce (no gather) ---
    row_id = i * row_tile + jax.lax.broadcasted_iota(jnp.int32, x.shape, 0)
    col_id = jax.lax.broadcasted_iota(jnp.int32, x.shape, 1)
    e_diag = jnp.sum(jnp.where(col_id == row_id, e, 0.0), axis=1, keepdims=True)

    # softmax(x)_ij * sigmoid(diag_i - x_ij)
    #   = (e_ij / sum_e_i) * (e_diag_i / (e_diag_i + e_ij))
    denom = jnp.maximum(sum_e * (e_diag + e), jnp.float32(1e-30))  # guard 0/0
    term = e * e_diag * pl.reciprocal(denom, approx=True)

    if n_total % row_tile != 0:
        # Last tile carries padded rows beyond n_total -> mask their contribution
        # (also kills any NaN/Inf from the unspecified padded block data).
        term = jnp.where(row_id < n_total, term, 0.0)

    acc_ref[...] += jnp.sum(term, keepdims=True)      # (1,1) running sum

    @pl.when(i == pl.num_programs(0) - 1)
    def _finalize():
        out_ref[0, 0] = -jnp.log(acc_ref[0, 0] * jnp.float32(inv_count))


def _row_tile_for(n):
    # Full block (single grid step) for moderate N; otherwise a multiple-of-32
    # row tile sized so one (TR, N) f32 tile is <= ~4 MiB, keeping the live set
    # (double-buffered input + a few temporaries) well under the 32 MiB scoped
    # VMEM budget on every TPU generation (v5e/v6e/v7x).
    if n <= 1024:
        return n
    tr = (4 << 20) // (4 * n)
    tr = max(32, (tr // 32) * 32)
    return min(tr, 1024)


def bpr_max_loss(logit, row_tile=None):
    """logit: [N, N] float array (f32 or bf16) -> scalar float32 loss."""
    n, n2 = logit.shape
    assert n == n2, "BPR_max expects a square [N, N] logit matrix"
    tr = _row_tile_for(n) if row_tile is None else row_tile
    num_tiles = pl.cdiv(n, tr)

    kernel = functools.partial(
        _bpr_max_kernel,
        n_total=n,
        row_tile=tr,
        inv_count=1.0 / (float(n) * float(n)),
    )
    out = pl.pallas_call(
        kernel,
        out_shape=jax.ShapeDtypeStruct((1, 1), jnp.float32),
        grid_spec=pltpu.PrefetchScalarGridSpec(
            num_scalar_prefetch=0,
            grid=(num_tiles,),
            in_specs=[pl.BlockSpec((tr, n), lambda i: (i, 0))],
            out_specs=pl.BlockSpec(memory_space=pltpu.MemorySpace.SMEM),
            scratch_shapes=[pltpu.VMEM((1, 1), jnp.float32)],
        ),
        compiler_params=pltpu.CompilerParams(
            dimension_semantics=("arbitrary",),   # accumulator carries across tiles
            vmem_limit_bytes=32 << 20,
        ),
    )(logit)
    return out[0, 0]


def bpr_max_ref(logit):
    """Pure-JAX reference mirroring the PyTorch forward."""
    x = logit.astype(jnp.float32)
    sm = jax.nn.softmax(x, axis=1)
    diff = jnp.diag(x)[:, None] - x
    return -jnp.log(jnp.mean(sm * jax.nn.sigmoid(diff)))


if __name__ == "__main__":
    k1, k2 = jax.random.split(jax.random.PRNGKey(0))

    # Case 1: typical small in-batch size -> single full-block grid step.
    n1 = 32
    logit1 = jax.random.normal(k1, (n1, n1), dtype=jnp.float32)
    loss1 = jax.block_until_ready(bpr_max_loss(logit1))
    ref1 = jax.block_until_ready(bpr_max_ref(logit1))
    assert jnp.allclose(loss1, ref1, atol=5e-4, rtol=5e-4), (loss1, ref1)

    # Case 2: forces the multi-tile grid path + partial-tile row masking.
    n2 = 40
    logit2 = jax.random.normal(k2, (n2, n2), dtype=jnp.float32)
    loss2 = jax.block_until_ready(bpr_max_loss(logit2, row_tile=16))
    ref2 = jax.block_until_ready(bpr_max_ref(logit2))
    assert jnp.allclose(loss2, ref2, atol=5e-4, rtol=5e-4), (loss2, ref2)

    print("KERNEL_OK")
</pallas_src>

<mosaic_0001>
module attributes {stable_mosaic.version = 11 : i64} {
  func.func @_bpr_max_kernel(%arg0: i32, %arg1: memref<32x32xf32, #tpu.memory_space<vmem>>, %arg2: memref<1x1xf32, #tpu.memory_space<smem>>, %arg3: memref<1x1xf32, #tpu.memory_space<vmem>>) attributes {dimension_semantics = [#tpu.dimension_semantics<arbitrary>], iteration_bounds = array<i64: 1>, scalar_prefetch = 0 : i64, scratch_operands = 1 : i64, tpu.core_type = #tpu.core_type<tc>, window_params = [{transform_indices = @transform_0, window_bounds = array<i64: 32, 32>}, {transform_indices = @transform_1, window_bounds = array<i64: 1, 1>}]} {
    %c0_i32 = arith.constant 0 : i32
    %0 = arith.cmpi eq, %arg0, %c0_i32 : i32
    %1 = arith.extui %0 : i1 to i32
    %c0_i32_0 = arith.constant 0 : i32
    %2 = arith.cmpi ne, %1, %c0_i32_0 : i32
    scf.if %2 {
      %cst_13 = arith.constant 0.000000e+00 : f32
      %42 = vector.broadcast %cst_13 : f32 to vector<1x1xf32>
      %c0_14 = arith.constant 0 : index
      %c0_15 = arith.constant 0 : index
      %43 = vector.load %arg3[%c0_14, %c0_15] : memref<1x1xf32, #tpu.memory_space<vmem>>, vector<1x1xf32>
      tpu.vector_store %arg3[%c0_14, %c0_15], %42 {strides = array<i32>} : memref<1x1xf32, #tpu.memory_space<vmem>>, vector<1x1xf32>,
    } else {
    }
    %c0 = arith.constant 0 : index
    %c0_1 = arith.constant 0 : index
    %3 = vector.load %arg1[%c0, %c0_1] : memref<32x32xf32, #tpu.memory_space<vmem>>, vector<32x32xf32>
    %cst = arith.constant dense<0xFF800000> : vector<32xf32>
    %4 = vector.multi_reduction <maximumf>, %3, %cst [1] : vector<32x32xf32> to vector<32xf32>
    %5 = vector.shape_cast %4 : vector<32xf32> to vector<32x1xf32>
    %6 = vector.broadcast %5 : vector<32x1xf32> to vector<32x32xf32>
    %7 = arith.subf %3, %6 : vector<32x32xf32>
    %8 = math.exp %7 : vector<32x32xf32>
    %cst_2 = arith.constant dense<0.000000e+00> : vector<32xf32>
    %9 = vector.multi_reduction <add>, %8, %cst_2 [1] : vector<32x32xf32> to vector<32xf32>
    %10 = vector.shape_cast %9 : vector<32xf32> to vector<32x1xf32>
    %c32_i32 = arith.constant 32 : i32
    %11 = arith.muli %arg0, %c32_i32 : i32
    %12 = tpu.iota {dimensions = array<i32: 0>} : vector<32x32xi32>
    %13 = vector.broadcast %11 : i32 to vector<32x32xi32>
    %14 = arith.addi %13, %12 : vector<32x32xi32>
    %15 = tpu.iota {dimensions = array<i32: 1>} : vector<32x32xi32>
    %16 = arith.cmpi eq, %15, %14 : vector<32x32xi32>
    %cst_3 = arith.constant 0.000000e+00 : f32
    %17 = vector.broadcast %cst_3 : f32 to vector<32x32xf32>
    %18 = arith.select %16, %8, %17 : vector<32x32xi1>, vector<32x32xf32>
    %cst_4 = arith.constant dense<0.000000e+00> : vector<32xf32>
    %19 = vector.multi_reduction <add>, %18, %cst_4 [1] : vector<32x32xf32> to vector<32xf32>
    %20 = vector.shape_cast %19 : vector<32xf32> to vector<32x1xf32>
    %21 = vector.broadcast %20 : vector<32x1xf32> to vector<32x32xf32>
    %22 = arith.addf %21, %8 : vector<32x32xf32>
    %23 = vector.broadcast %10 : vector<32x1xf32> to vector<32x32xf32>
    %24 = arith.mulf %23, %22 : vector<32x32xf32>
    %cst_5 = arith.constant 1.000000e-30 : f32
    %25 = vector.broadcast %cst_5 : f32 to vector<32x32xf32>
    %26 = arith.maximumf %24, %25 : vector<32x32xf32>
    %27 = vector.broadcast %20 : vector<32x1xf32> to vector<32x32xf32>
    %28 = arith.mulf %8, %27 : vector<32x32xf32>
    %29 = tpu.reciprocal %26 {approx = true} : vector<32x32xf32> -> vector<32x32xf32>
    %30 = arith.mulf %28, %29 : vector<32x32xf32>
    %c0_6 = arith.constant 0 : index
    %c0_7 = arith.constant 0 : index
    %31 = vector.load %arg3[%c0_6, %c0_7] : memref<1x1xf32, #tpu.memory_space<vmem>>, vector<1x1xf32>
    %32 = vector.shape_cast %30 : vector<32x32xf32> to vector<1x32x32xf32>
    %cst_8 = arith.constant dense<0.000000e+00> : vector<1xf32>
    %33 = vector.multi_reduction <add>, %32, %cst_8 [1, 2] : vector<1x32x32xf32> to vector<1xf32>
    %34 = vector.shape_cast %33 : vector<1xf32> to vector<1x1x1xf32>
    %35 = vector.extract %34[0, 0, 0] : f32 from vector<1x1x1xf32>
    %36 = vector.broadcast %35 : f32 to vector<1x1xf32>
    %37 = arith.addf %31, %36 : vector<1x1xf32>
    %c0_9 = arith.constant 0 : index
    %c0_10 = arith.constant 0 : index
    %38 = vector.load %arg3[%c0_9, %c0_10] : memref<1x1xf32, #tpu.memory_space<vmem>>, vector<1x1xf32>
    tpu.vector_store %arg3[%c0_9, %c0_10], %37 {strides = array<i32>} : memref<1x1xf32, #tpu.memory_space<vmem>>, vector<1x1xf32>,
    %c0_i32_11 = arith.constant 0 : i32
    %39 = arith.cmpi eq, %arg0, %c0_i32_11 : i32
    %40 = arith.extui %39 : i1 to i32
    %c0_i32_12 = arith.constant 0 : i32
    %41 = arith.cmpi ne, %40, %c0_i32_12 : i32
    scf.if %41 {
      %c0_13 = arith.constant 0 : index
      %c0_14 = arith.constant 0 : index
      %42 = vector.load %arg3[%c0_13, %c0_14] : memref<1x1xf32, #tpu.memory_space<vmem>>, vector<1x1xf32>
      %43 = vector.extract %42[0, 0] : f32 from vector<1x1xf32>
      %cst_15 = arith.constant 9.765625E-4 : f32
      %44 = arith.mulf %43, %cst_15 : f32
      %45 = math.log %44 : f32
      %cst_16 = arith.constant 0.000000e+00 : f32
      %46 = arith.subf %cst_16, %45 : f32
      %c0_17 = arith.constant 0 : index
      %c0_18 = arith.constant 0 : index
      %47 = memref.load %arg2[%c0_17, %c0_18] : memref<1x1xf32, #tpu.memory_space<smem>>
      memref.store %46, %arg2[%c0_17, %c0_18] : memref<1x1xf32, #tpu.memory_space<smem>>
    } else {
    }
    return
  }
  func.func @transform_0(%arg0: i32) -> (i32, i32) {
    %c0_i32 = arith.constant 0 : i32
    %c0_i32_0 = arith.constant 0 : i32
    return %arg0, %c0_i32 : i32, i32
  }
  func.func @transform_1(%arg0: i32) -> (i32, i32) {
    %c0_i32 = arith.constant 0 : i32
    %c0_i32_0 = arith.constant 0 : i32
    %c0_i32_1 = arith.constant 0 : i32
    return %c0_i32, %c0_i32_0 : i32, i32
  }
}

</mosaic_0001>

<llo_original>
// kernel: tpu_custom_call.1
$region0: #{tpu_custom_call.1}
  #allocation0 [shape = 'u32[]', space=smem, size = 0x4, offset = 0x4, fixed_abs, tag = 'smem constant byte address 0x4 - core index']
  #allocation1 [shape = 'u32[144,128]{1,0:T(1,128)}', space=vmem, size = 0x12000, scoped, tag = 'internal scratch']
  #allocation2 [shape = 'f32[1,1]{1,0:T(1,128)}', space=vmem, size = 0x200, scoped, tag = 'scratch operand']
  %s0 = inlined_call_operand.hbm [shape: f32[32,32], index: 0, kind: input, shape index: {}]
  %s1 = inlined_call_operand.hbm [shape: f32[1,1], index: 1, kind: output, shape index: {}]
  %s2 = sld [smem:[#allocation0]]
  $region26: #{tpu_custom_call.1} parent=0
    _
  %s4 = ssub.s32 1, %s2
  %s5 = scalar_select 0, %s4, %s2
  $region1: #{tpu_custom_call.1} parent=0
    #allocation3 [shape = 'u8[16384]{0}', space=vmem, size = 0x4000, scoped, tag = 'input window, operand 0, single buffered']
    #allocation4 [shape = 's32[1]{0}', space=sflag, size = 0x4, scoped, tag = 'scoped memory for tpu_custom_call.1']
    #allocation5 [shape = 's32[1]{0}', space=sflag, size = 0x4, scoped, tag = 'scoped memory for tpu_custom_call.1']
    #allocation6 [shape = 'u8[512]{0}', space=smem, size = 0x200, scoped, tag = 'output window, operand 0, single buffered']
    %6 = vsyncpa [#allocation4], 0
    %7 = vsyncpa [#allocation5], 0
    // Predicated region
    $region2: #{tpu_custom_call.1} parent=1 // pred_check
      _
    $region3: #{tpu_custom_call.1} parent=1 // pred_check_branch
      %9 = sbr.rel (0) target = $region5
    $region4: #{tpu_custom_call.1} parent=1 // pred_region
      %s11 = ssub.s32 512, 512
      %12 = vsyncadd [#allocation4], %s11
      %s13 = sshll.u32 [#allocation3], 4
      %s14 = int_to_ptr.vmem [resolvable:$true] %s13
      %19 = dma.hbm_to_vmem [thread:$0]  %s0, 512, %s14, [#allocation4], 128, 128, 8
    $region5: #{tpu_custom_call.1} parent=1 // pred_fallthru
      _
    // Predicated region
    $region6: #{tpu_custom_call.1} parent=1 // pred_check
      _
    $region7: #{tpu_custom_call.1} parent=1 // pred_check_branch
      %21 = sbr.rel (0) target = $region9
    $region8: #{tpu_custom_call.1} parent=1 // pred_region
      %22 = dma.done [#allocation4], 512
    $region9: #{tpu_custom_call.1} parent=1 // pred_fallthru
      _
    %p23 = scmp.eq.s32.totalorder 0, 0
    // Predicated region
    $region10: #{tpu_custom_call.1} parent=1 // pred_check
      %p24 = pneg %p23
    $region11: #{tpu_custom_call.1} parent=1 // pred_check_branch
      %26 = sbr.rel (%p24) target = $region13
    $region12: #{tpu_custom_call.1} parent=1 // pred_region
      %vm27 = vcmask 0
      %28 = vst.msk [vmem:[#allocation2] sm:$0x1] %vm27, 0.0
    $region13: #{tpu_custom_call.1} parent=1 // pred_fallthru
      _
    %v29 = vld [vmem:[#allocation3] sm:$0xff]
    %v30 = vld [vmem:[#allocation3 + $0x8] sm:$0xff]
    %v31 = vld [vmem:[#allocation3 + $0x10] sm:$0xff]
    %v32 = vld [vmem:[#allocation3 + $0x18] sm:$0xff]
    %vm33 = vcmask 261120
    %v34 = vsel %vm33, %v29, -inf
    %35 = vmax.xlane.f32.xlu0 %v34
    %v36 = vpop.xlane.xlu0 %35
    %v37 = vsel %vm33, %v30, -inf
    %38 = vmax.xlane.f32.xlu0 %v37
    %v39 = vpop.xlane.xlu0 %38
    %v40 = vsel %vm33, %v31, -inf
    %41 = vmax.xlane.f32.xlu0 %v40
    %v42 = vpop.xlane.xlu0 %41
    %v43 = vsel %vm33, %v32, -inf
    %44 = vmax.xlane.f32.xlu0 %v43
    %v45 = vpop.xlane.xlu0 %44
    %v46 = vsub.f32 %v29, %v36
    %v47 = vsub.f32 %v30, %v39
    %v48 = vsub.f32 %v31, %v42
    %v49 = vsub.f32 %v32, %v45
    %v50 = vmul.f32 %v46, 1.442695
    %v51 = vpow.pop %v50
    %v52 = vmul.f32 %v47, 1.442695
    %v53 = vpow.pop %v52
    %v54 = vmul.f32 %v48, 1.442695
    %v55 = vpow.pop %v54
    %v56 = vmul.f32 %v49, 1.442695
    %v57 = vpow.pop %v56
    %v58 = vsel %vm33, %v51, 0.0
    %59 = vadd.xlane.f32.xlu0 %v58
    %v60 = vpop.xlane.xlu0 %59
    %v61 = vsel %vm33, %v53, 0.0
    %62 = vadd.xlane.f32.xlu0 %v61
    %v63 = vpop.xlane.xlu0 %62
    %v64 = vsel %vm33, %v55, 0.0
    %65 = vadd.xlane.f32.xlu0 %v64
    %v66 = vpop.xlane.xlu0 %65
    %v67 = vsel %vm33, %v57, 0.0
    %68 = vadd.xlane.f32.xlu0 %v67
    %v69 = vpop.xlane.xlu0 %68
    %s70 = smul.u32 0, 32
    %v71 = vlaneseq
    %v72 = vshrl.u32 %v71, 7
    %v73 = vadd.s32 %v72, 8
    %v74 = vadd.s32 %v72, 16
    %v75 = vadd.s32 %v72, 24
    %v76 = vstv %s70
    %v77 = vadd.s32 %v76, %v72
    %v78 = vadd.s32 %v76, %v73
    %v79 = vadd.s32 %v76, %v74
    %v80 = vadd.s32 %v76, %v75
    %v81 = vlaneseq
    %v82 = vand.u32 %v81, 127
    %vm83 = vcmp.eq.s32.totalorder %v82, %v77
    %vm84 = vcmp.eq.s32.totalorder %v82, %v78
    %vm85 = vcmp.eq.s32.totalorder %v82, %v79
    %vm86 = vcmp.eq.s32.totalorder %v82, %v80
    %v87 = vsel %vm83, %v51, 0.0
    %v88 = vsel %vm84, %v53, 0.0
    %v89 = vsel %vm85, %v55, 0.0
    %v90 = vsel %vm86, %v57, 0.0
    %v91 = vsel %vm33, %v87, 0.0
    %92 = vadd.xlane.f32.xlu0 %v91
    %v93 = vpop.xlane.xlu0 %92
    %v94 = vsel %vm33, %v88, 0.0
    %95 = vadd.xlane.f32.xlu0 %v94
    %v96 = vpop.xlane.xlu0 %95
    %v97 = vsel %vm33, %v89, 0.0
    %98 = vadd.xlane.f32.xlu0 %v97
    %v99 = vpop.xlane.xlu0 %98
    %v100 = vsel %vm33, %v90, 0.0
    %101 = vadd.xlane.f32.xlu0 %v100
    %v102 = vpop.xlane.xlu0 %101
    %v103 = vadd.f32 %v93, %v51
    %v104 = vadd.f32 %v96, %v53
    %v105 = vadd.f32 %v99, %v55
    %v106 = vadd.f32 %v102, %v57
    %v107 = vmul.f32 %v60, %v103
    %v108 = vmul.f32 %v63, %v104
    %v109 = vmul.f32 %v66, %v105
    %v110 = vmul.f32 %v69, %v106
    %v111 = vmax.f32 %v107, 1e-30
    %v112 = vmax.f32 %v108, 1e-30
    %v113 = vmax.f32 %v109, 1e-30
    %v114 = vmax.f32 %v110, 1e-30
    %v115 = vmul.f32 %v51, %v93
    %v116 = vmul.f32 %v53, %v96
    %v117 = vmul.f32 %v55, %v99
    %v118 = vmul.f32 %v57, %v102
    %v119 = vrcp.pop %v111
    %v120 = vrcp.pop %v112
    %v121 = vrcp.pop %v113
    %v122 = vrcp.pop %v114
    %v123 = vmul.f32 %v115, %v119
    %v124 = vmul.f32 %v116, %v120
    %v125 = vmul.f32 %v117, %v121
    %v126 = vmul.f32 %v118, %v122
    %v127 = vld [vmem:[#allocation2] sm:$0x1]
    %v128 = vsel %vm33, %v123, 0.0
    %v129 = vsel %vm33, %v124, 0.0
    %v130 = vadd.f32 %v128, %v129
    %v131 = vsel %vm33, %v125, 0.0
    %v132 = vadd.f32 %v130, %v131
    %v133 = vsel %vm33, %v126, 0.0
    %v134 = vadd.f32 %v132, %v133
    %135 = vadd.xlane.f32.xlu0 %v134
    %v136 = vpop.xlane.xlu0 %135
    %v137 = vrot.slane %v136, 4
    %v138 = vadd.f32 %v136, %v137
    %v139 = vrot.slane %v138, 2
    %v140 = vadd.f32 %v138, %v139
    %v141 = vrot.slane %v140, 1
    %v142 = vadd.f32 %v140, %v141
    %s143 = vtos %v142
    %v144 = vstv %s143
    %v145 = vadd.f32 %v127, %v144
    %vm146 = vcmask 0
    %147 = vst.msk [vmem:[#allocation2] sm:$0x1] %vm146, %v145
    // Predicated region
    $region14: #{tpu_custom_call.1} parent=1 // pred_check
      %p148 = pneg %p23
    $region15: #{tpu_custom_call.1} parent=1 // pred_check_branch
      %150 = sbr.rel (%p148) target = $region17
    $region16: #{tpu_custom_call.1} parent=1 // pred_region
      %v151 = vld [vmem:[#allocation2] sm:$0x1]
      %s152 = vtos %v151
      %s153 = smul.f32 %s152, 0.0009765625
      %v154 = vstv %s153
      %v155 = vlog2.pop %v154
      %v156 = vmul.f32 %v155, 0.6931472
      %s157 = vtos %v156
      %s158 = ssub.f32 0.0, %s157
      %s159 = scalar_lea.smem [#allocation6], 0
      %160 = sst [smem:[%s159]] %s158
    $region17: #{tpu_custom_call.1} parent=1 // pred_fallthru
      _
    // Predicated region
    $region18: #{tpu_custom_call.1} parent=1 // pred_check
      _
    $region19: #{tpu_custom_call.1} parent=1 // pred_check_branch
      %162 = sbr.rel (0) target = $region21
    $region20: #{tpu_custom_call.1} parent=1 // pred_region
      %s164 = ssub.s32 16, 16
      %165 = vsyncadd [#allocation5], %s164
      %168 = dma.smem_to_hbm [#allocation6], 16, %s1, [#allocation5]
    $region21: #{tpu_custom_call.1} parent=1 // pred_fallthru
      _
    // Predicated region
    $region22: #{tpu_custom_call.1} parent=1 // pred_check
      _
    $region23: #{tpu_custom_call.1} parent=1 // pred_check_branch
      %170 = sbr.rel (0) target = $region25
    $region24: #{tpu_custom_call.1} parent=1 // pred_region
      %171 = dma.done [#allocation5], 16
    $region25: #{tpu_custom_call.1} parent=1 // pred_fallthru
      _
    %172 = sfence
    %173 = vsyncpa [#allocation4], 1
    %174 = vsyncpa [#allocation5], 1

</llo_original>
